<compile_context>
chip_gen: v5e
topology: v5e:2x2
jax: 0.10.0
libtpu: 0.0.40
codegen_flags: <defaults>
</compile_context>

<pallas_src>
import functools

import jax
import jax.numpy as jnp
from jax.experimental import pallas as pl
from jax.experimental.pallas import tpu as pltpu


def _round_up(x, m):
    return ((x + m - 1) // m) * m


def insmlp_kernel(x_ref, w1_ref, b1_ref, w2_ref, b2_ref, wc_ref, bc_ref,
                  logits_ref, h_ref):
    """Fused feature_ex (2-layer MLP w/ ReLU) + classifier (Linear) for one
    tile of instances. Matmuls in bf16 -> f32 accumulation; VPU math in f32."""
    # Hoist bias reads (single broadcast each; JAX does not CSE broadcasts).
    b1 = b1_ref[...]                                   # (1, H) f32
    b2 = b2_ref[...]                                   # (1, H) f32
    bc = bc_ref[...]                                   # (1, C) f32

    # x arrives in its HBM dtype (f32); cast to bf16 in-register for the MXU.
    x = x_ref[...].astype(w1_ref.dtype)                # (tn, D) bf16
    h1 = jnp.dot(x, w1_ref[...],
                 preferred_element_type=jnp.float32)   # (tn, H) f32
    h1 = jnp.maximum(h1 + b1, 0.0)

    h2 = jnp.dot(h1.astype(w2_ref.dtype), w2_ref[...],
                 preferred_element_type=jnp.float32)   # (tn, H) f32
    h2 = jnp.maximum(h2 + b2, 0.0)

    logits = jnp.dot(h2.astype(wc_ref.dtype), wc_ref[...],
                     preferred_element_type=jnp.float32) + bc   # (tn, C) f32

    h_ref[...] = h2.astype(h_ref.dtype)
    logits_ref[...] = logits.astype(logits_ref.dtype)


def prepare_params(params):
    """One-time weight/bias cast (hoisted out of the per-forward path).

    Weights -> bf16 for the MXU, biases -> f32 (1, dim) rows for the VPU add.
    No padding is applied: the kernel handles arbitrary D/H/C extents.
    """
    bf16, f32 = jnp.bfloat16, jnp.float32
    return {
        "w1": params["w1"].astype(bf16),
        "w2": params["w2"].astype(bf16),
        "wc": params["wc"].astype(bf16),
        "b1": params["b1"].astype(f32).reshape(1, -1),
        "b2": params["b2"].astype(f32).reshape(1, -1),
        "bc": params["bc"].astype(f32).reshape(1, -1),
    }


def _vmem_estimate_bytes(tn, D, H, C):
    """Rough VMEM footprint: double-buffered x/out tiles + resident weights +
    headroom for matmul temporaries."""
    x_buf = 2 * tn * D * 4                         # x tile (f32), double-buffered
    out_buf = 2 * tn * (H + C) * 4                 # h + logits tiles (f32), dbl-buf
    w_buf = 2 * ((D * H + H * H + H * C) * 2       # bf16 weights (default dbl-buf)
                 + (2 * H + C) * 4)                # f32 biases
    scratch = 3 * tn * H * 4                       # intermediates / relayout slack
    return x_buf + out_buf + w_buf + scratch


@functools.partial(jax.jit, static_argnames=("tile_n",))
def insmlp_forward(inp, params, *, tile_n=1024):
    """Equivalent of insMLP.forward.

    inp    : (1, N, D)  -- a bag of N instances with D features each.
    params : output of prepare_params (bf16 weights, f32 (1,dim) biases).
    returns: (class_prob (N, C) f32, h (N, H) f32)
    """
    x = jnp.squeeze(inp, axis=0)                 # input.squeeze(0) -> (N, D)
    N, D = x.shape
    H = params["w1"].shape[1]
    C = params["wc"].shape[1]
    f32 = jnp.float32

    # Instance tile: multiple of 8 sublanes, clamped to N, and capped so the
    # grid has >= 2 steps (keeps both v7x TensorCores busy for moderate N).
    tn = min(tile_n, _round_up(N, 8))
    if N >= 16:
        tn = min(tn, _round_up((N + 1) // 2, 8))
    tn = max(8, tn)
    grid_n = pl.cdiv(N, tn)                      # no row padding; last tile partial

    vmem_limit = int(min(64 * 1024 * 1024,
                         max(32 * 1024 * 1024,
                             2 * _vmem_estimate_bytes(tn, D, H, C))))

    full2d = lambda shape: pl.BlockSpec(shape, lambda i: (0, 0))  # VMEM-resident

    logits, h = pl.pallas_call(
        insmlp_kernel,
        out_shape=(
            jax.ShapeDtypeStruct((N, C), f32),   # class logits (unpadded)
            jax.ShapeDtypeStruct((N, H), f32),   # features h   (unpadded)
        ),
        grid_spec=pl.GridSpec(
            grid=(grid_n,),
            in_specs=[
                pl.BlockSpec((tn, D), lambda i: (i, 0)),   # x tile (f32, cast in-kernel)
                full2d((D, H)),                            # w1 (resident)
                full2d((1, H)),                            # b1
                full2d((H, H)),                            # w2
                full2d((1, H)),                            # b2
                full2d((H, C)),                            # wc
                full2d((1, C)),                            # bc
            ],
            out_specs=[
                pl.BlockSpec((tn, C), lambda i: (i, 0)),
                pl.BlockSpec((tn, H), lambda i: (i, 0)),
            ],
        ),
        compiler_params=pltpu.CompilerParams(
            dimension_semantics=("parallel",),
            vmem_limit_bytes=vmem_limit),
    )(x, params["w1"], params["b1"], params["w2"], params["b2"],
      params["wc"], params["bc"])

    # .reshape(-1, n_class) from the PyTorch forward (already (N, C): no-op copy
    # is elided by XLA).
    return logits.reshape(-1, C), h


def init_params(key, D, H, C):
    k1, k2, k3 = jax.random.split(key, 3)
    scale = 0.05
    return {
        "w1": scale * jax.random.normal(k1, (D, H), jnp.float32),
        "b1": jnp.zeros((1, H), jnp.float32),
        "w2": scale * jax.random.normal(k2, (H, H), jnp.float32),
        "b2": jnp.zeros((1, H), jnp.float32),
        "wc": scale * jax.random.normal(k3, (H, C), jnp.float32),
        "bc": jnp.zeros((1, C), jnp.float32),
    }


def reference_forward(inp, params):
    """Plain-JAX reference mirroring the PyTorch forward (bf16 matmuls,
    f32 accumulation, matching the kernel's precision choices)."""
    bf16 = jnp.bfloat16
    x = jnp.squeeze(inp, axis=0)
    h = jnp.maximum(
        jnp.dot(x.astype(bf16), params["w1"].astype(bf16),
                preferred_element_type=jnp.float32) + params["b1"], 0.0)
    h = jnp.maximum(
        jnp.dot(h.astype(bf16), params["w2"].astype(bf16),
                preferred_element_type=jnp.float32) + params["b2"], 0.0)
    logits = jnp.dot(h.astype(bf16), params["wc"].astype(bf16),
                     preferred_element_type=jnp.float32) + params["bc"]
    return logits.reshape(-1, params["wc"].shape[1]), h


if __name__ == "__main__":
    key = jax.random.PRNGKey(0)
    kx, kp, kx2 = jax.random.split(key, 3)

    # Small demo shapes consistent with the module (bag of N instances).
    N, D, H, C = 16, 32, 32, 4          # instances, in-features, hidden, classes
    inp = jax.random.normal(kx, (1, N, D), jnp.float32)   # bag with leading dim 1
    raw_params = init_params(kp, D, H, C)
    params = prepare_params(raw_params)   # one-time cast, hoisted out of forward

    class_prob, h = insmlp_forward(inp, params)   # default tile_n=1024, auto-clamped
    jax.block_until_ready((class_prob, h))

    ref_prob, ref_h = reference_forward(inp, raw_params)
    assert class_prob.shape == (N, C) and h.shape == (N, H)
    assert jnp.allclose(class_prob, ref_prob, atol=1e-3, rtol=1e-3)
    assert jnp.allclose(h, ref_h, atol=1e-3, rtol=1e-3)

    # Ragged bag size: exercises the cdiv grid / masked partial-last-tile path.
    N2 = 19
    inp2 = jax.random.normal(kx2, (1, N2, D), jnp.float32)
    class_prob2, h2 = insmlp_forward(inp2, params)
    jax.block_until_ready((class_prob2, h2))
    ref_prob2, ref_h2 = reference_forward(inp2, raw_params)
    assert class_prob2.shape == (N2, C) and h2.shape == (N2, H)
    assert jnp.allclose(class_prob2, ref_prob2, atol=1e-3, rtol=1e-3)
    assert jnp.allclose(h2, ref_h2, atol=1e-3, rtol=1e-3)

    print("KERNEL_OK")
</pallas_src>

<mosaic_0001>
module attributes {stable_mosaic.version = 11 : i64} {
  func.func @insmlp_kernel(%arg0: i32, %arg1: memref<8x32xf32, #tpu.memory_space<vmem>>, %arg2: memref<32x32xbf16, #tpu.memory_space<vmem>>, %arg3: memref<1x32xf32, #tpu.memory_space<vmem>>, %arg4: memref<32x32xbf16, #tpu.memory_space<vmem>>, %arg5: memref<1x32xf32, #tpu.memory_space<vmem>>, %arg6: memref<32x4xbf16, #tpu.memory_space<vmem>>, %arg7: memref<1x4xf32, #tpu.memory_space<vmem>>, %arg8: memref<8x4xf32, #tpu.memory_space<vmem>>, %arg9: memref<8x32xf32, #tpu.memory_space<vmem>>) attributes {dimension_semantics = [#tpu.dimension_semantics<parallel>], iteration_bounds = array<i64: 2>, scalar_prefetch = 0 : i64, scratch_operands = 0 : i64, tpu.core_type = #tpu.core_type<tc>, window_params = [{transform_indices = @transform_0, window_bounds = array<i64: 8, 32>}, {pipeline_mode = #tpu.pipeline_mode<synchronous>, transform_indices = @transform_1, window_bounds = array<i64: 32, 32>}, {pipeline_mode = #tpu.pipeline_mode<synchronous>, transform_indices = @transform_2, window_bounds = array<i64: 1, 32>}, {pipeline_mode = #tpu.pipeline_mode<synchronous>, transform_indices = @transform_3, window_bounds = array<i64: 32, 32>}, {pipeline_mode = #tpu.pipeline_mode<synchronous>, transform_indices = @transform_4, window_bounds = array<i64: 1, 32>}, {pipeline_mode = #tpu.pipeline_mode<synchronous>, transform_indices = @transform_5, window_bounds = array<i64: 32, 4>}, {pipeline_mode = #tpu.pipeline_mode<synchronous>, transform_indices = @transform_6, window_bounds = array<i64: 1, 4>}, {transform_indices = @transform_7, window_bounds = array<i64: 8, 4>}, {transform_indices = @transform_8, window_bounds = array<i64: 8, 32>}]} {
    %c0 = arith.constant 0 : index
    %c0_0 = arith.constant 0 : index
    %0 = vector.load %arg3[%c0, %c0_0] : memref<1x32xf32, #tpu.memory_space<vmem>>, vector<1x32xf32>
    %c0_1 = arith.constant 0 : index
    %c0_2 = arith.constant 0 : index
    %1 = vector.load %arg5[%c0_1, %c0_2] : memref<1x32xf32, #tpu.memory_space<vmem>>, vector<1x32xf32>
    %c0_3 = arith.constant 0 : index
    %c0_4 = arith.constant 0 : index
    %2 = vector.load %arg7[%c0_3, %c0_4] : memref<1x4xf32, #tpu.memory_space<vmem>>, vector<1x4xf32>
    %c0_5 = arith.constant 0 : index
    %c0_6 = arith.constant 0 : index
    %3 = vector.load %arg1[%c0_5, %c0_6] : memref<8x32xf32, #tpu.memory_space<vmem>>, vector<8x32xf32>
    %4 = arith.truncf %3 : vector<8x32xf32> to vector<8x32xbf16>
    %c0_7 = arith.constant 0 : index
    %c0_8 = arith.constant 0 : index
    %5 = vector.load %arg2[%c0_7, %c0_8] : memref<32x32xbf16, #tpu.memory_space<vmem>>, vector<32x32xbf16>
    %cst = arith.constant dense<0.000000e+00> : vector<8x32xf32>
    %6 = tpu.matmul %4, %5, %cst {dimension_numbers = #tpu.dot_dimension_numbers<[1], [0], [0], [1], [0, 0, 1, 1], [], []>} : vector<8x32xbf16>, vector<32x32xbf16>, vector<8x32xf32> -> vector<8x32xf32>
    %7 = vector.broadcast %0 : vector<1x32xf32> to vector<8x32xf32>
    %8 = arith.addf %6, %7 : vector<8x32xf32>
    %cst_9 = arith.constant 0.000000e+00 : f32
    %9 = vector.broadcast %cst_9 : f32 to vector<8x32xf32>
    %10 = arith.maximumf %8, %9 : vector<8x32xf32>
    %11 = arith.truncf %10 : vector<8x32xf32> to vector<8x32xbf16>
    %c0_10 = arith.constant 0 : index
    %c0_11 = arith.constant 0 : index
    %12 = vector.load %arg4[%c0_10, %c0_11] : memref<32x32xbf16, #tpu.memory_space<vmem>>, vector<32x32xbf16>
    %cst_12 = arith.constant dense<0.000000e+00> : vector<8x32xf32>
    %13 = tpu.matmul %11, %12, %cst_12 {dimension_numbers = #tpu.dot_dimension_numbers<[1], [0], [0], [1], [0, 0, 1, 1], [], []>} : vector<8x32xbf16>, vector<32x32xbf16>, vector<8x32xf32> -> vector<8x32xf32>
    %14 = vector.broadcast %1 : vector<1x32xf32> to vector<8x32xf32>
    %15 = arith.addf %13, %14 : vector<8x32xf32>
    %cst_13 = arith.constant 0.000000e+00 : f32
    %16 = vector.broadcast %cst_13 : f32 to vector<8x32xf32>
    %17 = arith.maximumf %15, %16 : vector<8x32xf32>
    %18 = arith.truncf %17 : vector<8x32xf32> to vector<8x32xbf16>
    %c0_14 = arith.constant 0 : index
    %c0_15 = arith.constant 0 : index
    %19 = vector.load %arg6[%c0_14, %c0_15] : memref<32x4xbf16, #tpu.memory_space<vmem>>, vector<32x4xbf16>
    %cst_16 = arith.constant dense<0.000000e+00> : vector<8x4xf32>
    %20 = tpu.matmul %18, %19, %cst_16 {dimension_numbers = #tpu.dot_dimension_numbers<[1], [0], [0], [1], [0, 0, 1, 1], [], []>} : vector<8x32xbf16>, vector<32x4xbf16>, vector<8x4xf32> -> vector<8x4xf32>
    %21 = vector.broadcast %2 : vector<1x4xf32> to vector<8x4xf32>
    %22 = arith.addf %20, %21 : vector<8x4xf32>
    %c0_17 = arith.constant 0 : index
    %c0_18 = arith.constant 0 : index
    %23 = vector.load %arg9[%c0_17, %c0_18] : memref<8x32xf32, #tpu.memory_space<vmem>>, vector<8x32xf32>
    tpu.vector_store %arg9[%c0_17, %c0_18], %17 {strides = array<i32>} : memref<8x32xf32, #tpu.memory_space<vmem>>, vector<8x32xf32>,
    %c0_19 = arith.constant 0 : index
    %c0_20 = arith.constant 0 : index
    %24 = vector.load %arg8[%c0_19, %c0_20] : memref<8x4xf32, #tpu.memory_space<vmem>>, vector<8x4xf32>
    tpu.vector_store %arg8[%c0_19, %c0_20], %22 {strides = array<i32>} : memref<8x4xf32, #tpu.memory_space<vmem>>, vector<8x4xf32>,
    return
  }
  func.func @transform_0(%arg0: i32) -> (i32, i32) {
    %c0_i32 = arith.constant 0 : i32
    %c0_i32_0 = arith.constant 0 : i32
    return %arg0, %c0_i32 : i32, i32
  }
  func.func @transform_1(%arg0: i32) -> (i32, i32) {
    %c0_i32 = arith.constant 0 : i32
    %c0_i32_0 = arith.constant 0 : i32
    %c0_i32_1 = arith.constant 0 : i32
    return %c0_i32, %c0_i32_0 : i32, i32
  }
  func.func @transform_2(%arg0: i32) -> (i32, i32) {
    %c0_i32 = arith.constant 0 : i32
    %c0_i32_0 = arith.constant 0 : i32
    %c0_i32_1 = arith.constant 0 : i32
    return %c0_i32, %c0_i32_0 : i32, i32
  }
  func.func @transform_3(%arg0: i32) -> (i32, i32) {
    %c0_i32 = arith.constant 0 : i32
    %c0_i32_0 = arith.constant 0 : i32
    %c0_i32_1 = arith.constant 0 : i32
    return %c0_i32, %c0_i32_0 : i32, i32
  }
  func.func @transform_4(%arg0: i32) -> (i32, i32) {
    %c0_i32 = arith.constant 0 : i32
    %c0_i32_0 = arith.constant 0 : i32
    %c0_i32_1 = arith.constant 0 : i32
    return %c0_i32, %c0_i32_0 : i32, i32
  }
  func.func @transform_5(%arg0: i32) -> (i32, i32) {
    %c0_i32 = arith.constant 0 : i32
    %c0_i32_0 = arith.constant 0 : i32
    %c0_i32_1 = arith.constant 0 : i32
    return %c0_i32, %c0_i32_0 : i32, i32
  }
  func.func @transform_6(%arg0: i32) -> (i32, i32) {
    %c0_i32 = arith.constant 0 : i32
    %c0_i32_0 = arith.constant 0 : i32
    %c0_i32_1 = arith.constant 0 : i32
    return %c0_i32, %c0_i32_0 : i32, i32
  }
  func.func @transform_7(%arg0: i32) -> (i32, i32) {
    %c0_i32 = arith.constant 0 : i32
    %c0_i32_0 = arith.constant 0 : i32
    return %arg0, %c0_i32 : i32, i32
  }
  func.func @transform_8(%arg0: i32) -> (i32, i32) {
    %c0_i32 = arith.constant 0 : i32
    %c0_i32_0 = arith.constant 0 : i32
    return %arg0, %c0_i32 : i32, i32
  }
}

</mosaic_0001>

<llo_original>
// kernel: insmlp_forward.1
$region0: #{insmlp_forward.1}
  #allocation0 [shape = 'u32[]', space=smem, size = 0x4, offset = 0x4, fixed_abs, tag = 'smem constant byte address 0x4 - core index']
  #allocation1 [shape = 'u32[72,128]{1,0:T(1,128)}', space=vmem, size = 0x9000, scoped, tag = 'internal scratch']
  %s0 = inlined_call_operand.vmem [shape: f32[16,32], index: 0, kind: input, shape index: {}]
  %s1 = inlined_call_operand.hbm [shape: bf16[32,32], index: 1, kind: input, shape index: {}]
  %s2 = inlined_call_operand.vmem [shape: f32[1,32], index: 2, kind: input, shape index: {}]
  %s3 = inlined_call_operand.hbm [shape: bf16[32,32], index: 3, kind: input, shape index: {}]
  %s4 = inlined_call_operand.vmem [shape: f32[1,32], index: 4, kind: input, shape index: {}]
  %s5 = inlined_call_operand.vmem [shape: bf16[32,4], index: 5, kind: input, shape index: {}]
  %s6 = inlined_call_operand.vmem [shape: f32[1,4], index: 6, kind: input, shape index: {}]
  %s7 = inlined_call_operand.vmem [shape: f32[16,4], index: 7, kind: output, shape index: {0}]
  %s8 = inlined_call_operand.hbm [shape: f32[16,32], index: 8, kind: output, shape index: {1}]
  %9 = xla_tuple %s7, %s8
  %s10 = sld [smem:[#allocation0]]
  $region77: #{insmlp_forward.1} parent=0
    _
  %s12 = ssub.s32 1, %s10
  %s13 = scalar_select 0, %s12, %s10
  $region1: #{insmlp_forward.1} parent=0
    #allocation2 [shape = 'u8[8192]{0}', space=vmem, size = 0x2000, scoped, tag = 'input window, operand 1, single buffered']
    #allocation3 [shape = 's32[2]{0}', space=sflag, size = 0x8, scoped, tag = 'scoped memory for insmlp_forward.1']
    #allocation4 [shape = 's32[2]{0}', space=sflag, size = 0x8, scoped, tag = 'scoped memory for insmlp_forward.1']
    #allocation5 [shape = 'u8[8192]{0}', space=vmem, size = 0x2000, scoped, tag = 'input window, operand 3, single buffered']
    #allocation6 [shape = 's32[1]{0}', space=sflag, size = 0x4, scoped, tag = 'scoped memory for insmlp_forward.1']
    #allocation7 [shape = 'u8[8192]{0}', space=vmem, size = 0x2000, scoped, tag = 'output window, operand 1']
    %14 = vsyncpa [#allocation3], 0
    %15 = vsyncpa [#allocation6], 0
    %16 = vsyncpa [#allocation4], 0
    %s17 = scalar_lea.sflag [#allocation4], 1
    %18 = vsyncpa %s17, 0
    loop: start=0, step=1, limit=4
    $region2: #{insmlp_forward.1} parent=1 // loop_pre_header
      _
    $region3: #{insmlp_forward.1} parent=1 // loop_header
      %s20 = sphi 0, %s24
      %p21 = scmp.ge.s32.totalorder %s20, 4
      %s30 = sphi 0, %s32
      %s33 = sphi 0, %s30
      %s34 = sphi 0, %s33
      %s50 = sphi 0, %s34
      %s54 = sphi 0, %s54
      %s56 = sphi 0, %s54
      %s57 = sphi 0, %s56
      %s71 = sphi 0, %s57
      %s75 = sphi 0, %s75
      %s77 = sphi 0, %s75
      %s78 = sphi 0, %s77
      %s92 = sphi 0, %s78
      %s96 = sphi 0, %s96
      %s98 = sphi 0, %s96
      %s99 = sphi 0, %s98
      %s113 = sphi 0, %s99
      %s117 = sphi 0, %s117
      %s119 = sphi 0, %s117
      %s120 = sphi 0, %s119
      %s134 = sphi 0, %s120
      %s138 = sphi 0, %s138
      %s140 = sphi 0, %s138
      %s141 = sphi 0, %s140
      %s155 = sphi 0, %s141
      %s159 = sphi 0, %s159
      %s161 = sphi 0, %s159
      %s162 = sphi 0, %s161
      %s176 = sphi 0, %s162
      %s182 = sphi 0, %s184
      %s185 = sphi 0, %s182
      %s186 = sphi 0, %s185
      %s202 = sphi 0, %s186
      %s208 = sphi 0, %s210
      %s211 = sphi 0, %s208
      %s212 = sphi 0, %s211
      %s228 = sphi 0, %s212
    $region4: #{insmlp_forward.1} parent=1 // loop_header_branch
      %23 = sbr.rel (%p21) target = $region8
    $region5: #{insmlp_forward.1} parent=1 // loop_body
      %s25 = ssub.s32 %s20, 1
      %s26 = ssub.s32 %s20, 2
      %s27 = sadd.s32 %s20, 1
      %s28 = ssub.s32 %s20, %s27
      %p29 = scmp.eq.s32.totalorder %s28, 0
      %s31 = sadd.s32 %s30, 1
      %s32 = scalar_select %p29, %s30, %s31
      %p35 = pneg %p29
      %p36 = scmp.eq.s32.totalorder %s20, 1
      %p37 = por %p35, %p36
      %p38 = scmp.ne.s32.totalorder %s30, %s33
      %p39 = scmp.eq.s32.totalorder %s20, 0
      %p40 = por %p38, %p39
      %p41 = scmp.ne.s32.totalorder %s30, %s33
      %p42 = scmp.eq.s32.totalorder %s25, 1
      %p43 = por %p41, %p42
      %p44 = scmp.ne.s32.totalorder %s33, %s34
      %p45 = scmp.eq.s32.totalorder %s25, 0
      %p46 = por %p44, %p45
      %p47 = scmp.ne.s32.totalorder %s33, %s34
      %p48 = scmp.eq.s32.totalorder %s26, 1
      %p49 = por %p47, %p48
      %p51 = scmp.ne.s32.totalorder %s34, %s50
      %p52 = scmp.eq.s32.totalorder %s26, 0
      %p53 = por %p51, %p52
      %s55 = sadd.s32 %s54, 1
      %p58 = scmp.eq.s32.totalorder %s20, 1
      %p59 = scmp.ne.s32.totalorder %s54, %s56
      %p60 = scmp.eq.s32.totalorder %s20, 0
      %p61 = por %p59, %p60
      %p62 = scmp.ne.s32.totalorder %s54, %s56
      %p63 = scmp.eq.s32.totalorder %s25, 1
      %p64 = por %p62, %p63
      %p65 = scmp.ne.s32.totalorder %s56, %s57
      %p66 = scmp.eq.s32.totalorder %s25, 0
      %p67 = por %p65, %p66
      %p68 = scmp.ne.s32.totalorder %s56, %s57
      %p69 = scmp.eq.s32.totalorder %s26, 1
      %p70 = por %p68, %p69
      %p72 = scmp.ne.s32.totalorder %s57, %s71
      %p73 = scmp.eq.s32.totalorder %s26, 0
      %p74 = por %p72, %p73
      %s76 = sadd.s32 %s75, 1
      %p79 = scmp.eq.s32.totalorder %s20, 1
      %p80 = scmp.ne.s32.totalorder %s75, %s77
      %p81 = scmp.eq.s32.totalorder %s20, 0
      %p82 = por %p80, %p81
      %p83 = scmp.ne.s32.totalorder %s75, %s77
      %p84 = scmp.eq.s32.totalorder %s25, 1
      %p85 = por %p83, %p84
      %p86 = scmp.ne.s32.totalorder %s77, %s78
      %p87 = scmp.eq.s32.totalorder %s25, 0
      %p88 = por %p86, %p87
      %p89 = scmp.ne.s32.totalorder %s77, %s78
      %p90 = scmp.eq.s32.totalorder %s26, 1
      %p91 = por %p89, %p90
      %p93 = scmp.ne.s32.totalorder %s78, %s92
      %p94 = scmp.eq.s32.totalorder %s26, 0
      %p95 = por %p93, %p94
      %s97 = sadd.s32 %s96, 1
      %p100 = scmp.eq.s32.totalorder %s20, 1
      %p101 = scmp.ne.s32.totalorder %s96, %s98
      %p102 = scmp.eq.s32.totalorder %s20, 0
      %p103 = por %p101, %p102
      %p104 = scmp.ne.s32.totalorder %s96, %s98
      %p105 = scmp.eq.s32.totalorder %s25, 1
      %p106 = por %p104, %p105
      %p107 = scmp.ne.s32.totalorder %s98, %s99
      %p108 = scmp.eq.s32.totalorder %s25, 0
      %p109 = por %p107, %p108
      %p110 = scmp.ne.s32.totalorder %s98, %s99
      %p111 = scmp.eq.s32.totalorder %s26, 1
      %p112 = por %p110, %p111
      %p114 = scmp.ne.s32.totalorder %s99, %s113
      %p115 = scmp.eq.s32.totalorder %s26, 0
      %p116 = por %p114, %p115
      %s118 = sadd.s32 %s117, 1
      %p121 = scmp.eq.s32.totalorder %s20, 1
      %p122 = scmp.ne.s32.totalorder %s117, %s119
      %p123 = scmp.eq.s32.totalorder %s20, 0
      %p124 = por %p122, %p123
      %p125 = scmp.ne.s32.totalorder %s117, %s119
      %p126 = scmp.eq.s32.totalorder %s25, 1
      %p127 = por %p125, %p126
      %p128 = scmp.ne.s32.totalorder %s119, %s120
      %p129 = scmp.eq.s32.totalorder %s25, 0
      %p130 = por %p128, %p129
      %p131 = scmp.ne.s32.totalorder %s119, %s120
      %p132 = scmp.eq.s32.totalorder %s26, 1
      %p133 = por %p131, %p132
      %p135 = scmp.ne.s32.totalorder %s120, %s134
      %p136 = scmp.eq.s32.totalorder %s26, 0
      %p137 = por %p135, %p136
      %s139 = sadd.s32 %s138, 1
      %p142 = scmp.eq.s32.totalorder %s20, 1
      %p143 = scmp.ne.s32.totalorder %s138, %s140
      %p144 = scmp.eq.s32.totalorder %s20, 0
      %p145 = por %p143, %p144
      %p146 = scmp.ne.s32.totalorder %s138, %s140
      %p147 = scmp.eq.s32.totalorder %s25, 1
      %p148 = por %p146, %p147
      %p149 = scmp.ne.s32.totalorder %s140, %s141
      %p150 = scmp.eq.s32.totalorder %s25, 0
      %p151 = por %p149, %p150
      %p152 = scmp.ne.s32.totalorder %s140, %s141
      %p153 = scmp.eq.s32.totalorder %s26, 1
      %p154 = por %p152, %p153
      %p156 = scmp.ne.s32.totalorder %s141, %s155
      %p157 = scmp.eq.s32.totalorder %s26, 0
      %p158 = por %p156, %p157
      %s160 = sadd.s32 %s159, 1
      %p163 = scmp.eq.s32.totalorder %s20, 1
      %p164 = scmp.ne.s32.totalorder %s159, %s161
      %p165 = scmp.eq.s32.totalorder %s20, 0
      %p166 = por %p164, %p165
      %p167 = scmp.ne.s32.totalorder %s159, %s161
      %p168 = scmp.eq.s32.totalorder %s25, 1
      %p169 = por %p167, %p168
      %p170 = scmp.ne.s32.totalorder %s161, %s162
      %p171 = scmp.eq.s32.totalorder %s25, 0
      %p172 = por %p170, %p171
      %p173 = scmp.ne.s32.totalorder %s161, %s162
      %p174 = scmp.eq.s32.totalorder %s26, 1
      %p175 = por %p173, %p174
      %p177 = scmp.ne.s32.totalorder %s162, %s176
      %p178 = scmp.eq.s32.totalorder %s26, 0
      %p179 = por %p177, %p178
      %s180 = ssub.s32 %s20, %s27
      %p181 = scmp.eq.s32.totalorder %s180, 0
      %s183 = sadd.s32 %s182, 1
      %s184 = scalar_select %p181, %s182, %s183
      %p187 = pneg %p181
      %p188 = scmp.eq.s32.totalorder %s20, 1
      %p189 = por %p187, %p188
      %p190 = scmp.ne.s32.totalorder %s182, %s185
      %p191 = scmp.eq.s32.totalorder %s20, 0
      %p192 = por %p190, %p191
      %p193 = scmp.ne.s32.totalorder %s182, %s185
      %p194 = scmp.eq.s32.totalorder %s25, 1
      %p195 = por %p193, %p194
      %p196 = scmp.ne.s32.totalorder %s185, %s186
      %p197 = scmp.eq.s32.totalorder %s25, 0
      %p198 = por %p196, %p197
      %p199 = scmp.ne.s32.totalorder %s185, %s186
      %p200 = scmp.eq.s32.totalorder %s26, 1
      %p201 = por %p199, %p200
      %p203 = scmp.ne.s32.totalorder %s186, %s202
      %p204 = scmp.eq.s32.totalorder %s26, 0
      %p205 = por %p203, %p204
      %s206 = ssub.s32 %s20, %s27
      %p207 = scmp.eq.s32.totalorder %s206, 0
      %s209 = sadd.s32 %s208, 1
      %s210 = scalar_select %p207, %s208, %s209
      %p213 = pneg %p207
      %p214 = scmp.eq.s32.totalorder %s20, 1
      %p215 = por %p213, %p214
      %p216 = scmp.ne.s32.totalorder %s208, %s211
      %p217 = scmp.eq.s32.totalorder %s20, 0
      %p218 = por %p216, %p217
      %p219 = scmp.ne.s32.totalorder %s208, %s211
      %p220 = scmp.eq.s32.totalorder %s25, 1
      %p221 = por %p219, %p220
      %p222 = scmp.ne.s32.totalorder %s211, %s212
      %p223 = scmp.eq.s32.totalorder %s25, 0
      %p224 = por %p222, %p223
      %p225 = scmp.ne.s32.totalorder %s211, %s212
      %p226 = scmp.eq.s32.totalorder %s26, 1
      %p227 = por %p225, %p226
      %p229 = scmp.ne.s32.totalorder %s212, %s228
      %p230 = scmp.eq.s32.totalorder %s26, 0
      %p231 = por %p229, %p230
      %p232 = scmp.le.s32.totalorder 1, %s20
      %p233 = scmp.lt.s32.totalorder %s20, 3
      %p234 = pnand %p232, %p233
      %p235 = pneg %p234
      // Predicated region
      $region9: #{insmlp_forward.1} parent=5 // pred_check
        _
      $region10: #{insmlp_forward.1} parent=5 // pred_check_branch
        %237 = sbr.rel (%p234) target = $region12
      $region11: #{insmlp_forward.1} parent=5 // pred_region
        %s238 = ssub.s32 %s20, 1
        // Predicated region
        $region13: #{insmlp_forward.1} parent=11 // pred_check
          %p239 = pneg %p67
        $region14: #{insmlp_forward.1} parent=11 // pred_check_branch
          %241 = sbr.rel (%p239) target = $region16
        $region15: #{insmlp_forward.1} parent=11 // pred_region
          %243 = vsyncadd [#allocation3], 0
          %s244 = sshll.u32 %s1, 4
          %s245 = int_to_ptr.hbm [resolvable:$true] %s244
          %s246 = sshll.u32 [#allocation2], 4
          %s247 = int_to_ptr.vmem [resolvable:$true] %s246
          %252 = dma.hbm_to_vmem [thread:$0]  %s245, 256, %s247, [#allocation3], 64, 64, 4
        $region16: #{insmlp_forward.1} parent=11 // pred_fallthru
          _
        // Predicated region
        $region17: #{insmlp_forward.1} parent=11 // pred_check
          %p253 = pneg %p88
        $region18: #{insmlp_forward.1} parent=11 // pred_check_branch
          %255 = sbr.rel (%p253) target = $region20
        $region19: #{insmlp_forward.1} parent=11 // pred_region
          _
        $region20: #{insmlp_forward.1} parent=11 // pred_fallthru
          _
        // Predicated region
        $region21: #{insmlp_forward.1} parent=11 // pred_check
          %p256 = pneg %p109
        $region22: #{insmlp_forward.1} parent=11 // pred_check_branch
          %258 = sbr.rel (%p256) target = $region24
        $region23: #{insmlp_forward.1} parent=11 // pred_region
          %260 = vsyncadd [#allocation6], 0
          %s261 = sshll.u32 %s3, 4
          %s262 = int_to_ptr.hbm [resolvable:$true] %s261
          %s263 = sshll.u32 [#allocation5], 4
          %s264 = int_to_ptr.vmem [resolvable:$true] %s263
          %269 = dma.hbm_to_vmem [thread:$0]  %s262, 256, %s264, [#allocation6], 64, 64, 4
        $region24: #{insmlp_forward.1} parent=11 // pred_fallthru
          _
        // Predicated region
        $region25: #{insmlp_forward.1} parent=11 // pred_check
          %p270 = pneg %p130
        $region26: #{insmlp_forward.1} parent=11 // pred_check_branch
          %272 = sbr.rel (%p270) target = $region28
        $region27: #{insmlp_forward.1} parent=11 // pred_region
          _
        $region28: #{insmlp_forward.1} parent=11 // pred_fallthru
          _
        // Predicated region
        $region29: #{insmlp_forward.1} parent=11 // pred_check
          %p273 = pneg %p151
        $region30: #{insmlp_forward.1} parent=11 // pred_check_branch
          %275 = sbr.rel (%p273) target = $region32
        $region31: #{insmlp_forward.1} parent=11 // pred_region
          _
        $region32: #{insmlp_forward.1} parent=11 // pred_fallthru
          _
        // Predicated region
        $region33: #{insmlp_forward.1} parent=11 // pred_check
          %p276 = pneg %p172
        $region34: #{insmlp_forward.1} parent=11 // pred_check_branch
          %278 = sbr.rel (%p276) target = $region36
        $region35: #{insmlp_forward.1} parent=11 // pred_region
          _
        $region36: #{insmlp_forward.1} parent=11 // pred_fallthru
          _
      $region12: #{insmlp_forward.1} parent=5 // pred_fallthru
        _
      %p279 = scmp.lt.s32.totalorder %s20, 2
      // Predicated region
      $region37: #{insmlp_forward.1} parent=5 // pred_check
        %p280 = pneg %p279
      $region38: #{insmlp_forward.1} parent=5 // pred_check_branch
        %282 = sbr.rel (%p280) target = $region40
      $region39: #{insmlp_forward.1} parent=5 // pred_region
        // Predicated region
        $region41: #{insmlp_forward.1} parent=39 // pred_check
          %p283 = pneg %p40
        $region42: #{insmlp_forward.1} parent=39 // pred_check_branch
          %285 = sbr.rel (%p283) target = $region44
        $region43: #{insmlp_forward.1} parent=39 // pred_region
          %p286 = scmp.lt.s32.totalorder %s20, 1
          %s287 = scalar_select %p286, %s20, 1
          %s288 = smul.addr %s287, 8
          %s289 = scalar_lea.vmem %s0, %s288
        $region44: #{insmlp_forward.1} parent=39 // pred_fallthru
          _
      $region40: #{insmlp_forward.1} parent=5 // pred_fallthru
        _
      %p290 = scmp.le.s32.totalorder 1, %s20
      %p291 = scmp.lt.s32.totalorder %s20, 3
      %p292 = pnand %p290, %p291
      %p293 = pneg %p292
      // Predicated region
      $region45: #{insmlp_forward.1} parent=5 // pred_check
        _
      $region46: #{insmlp_forward.1} parent=5 // pred_check_branch
        %295 = sbr.rel (%p292) target = $region48
      $region47: #{insmlp_forward.1} parent=5 // pred_region
        %s296 = ssub.s32 %s20, 1
        // Predicated region
        $region49: #{insmlp_forward.1} parent=47 // pred_check
          %p297 = pneg %p67
        $region50: #{insmlp_forward.1} parent=47 // pred_check_branch
          %299 = sbr.rel (%p297) target = $region52
        $region51: #{insmlp_forward.1} parent=47 // pred_region
          %301 = dma.done [#allocation3], 256
        $region52: #{insmlp_forward.1} parent=47 // pred_fallthru
          _
        // Predicated region
        $region53: #{insmlp_forward.1} parent=47 // pred_check
          %p302 = pneg %p109
        $region54: #{insmlp_forward.1} parent=47 // pred_check_branch
          %304 = sbr.rel (%p302) target = $region56
        $region55: #{insmlp_forward.1} parent=47 // pred_region
          %306 = dma.done [#allocation6], 256
        $region56: #{insmlp_forward.1} parent=47 // pred_fallthru
          _
        %p307 = scmp.lt.s32.totalorder %s25, 1
        %s308 = scalar_select %p307, %s25, 1
        %s309 = smul.addr %s308, 8
        %s310 = scalar_lea.vmem %s0, %s309
        %p311 = pneg %p46
        %p312 = pneg %p43
        %p313 = pneg %p67
        %p314 = pneg %p64
        %p315 = pneg %p88
        %p316 = pneg %p85
        %p317 = pneg %p109
        %p318 = pneg %p106
        %p319 = pneg %p130
        %p320 = pneg %p127
        %p321 = pneg %p151
        %p322 = pneg %p148
        %p323 = pneg %p172
        %p324 = pneg %p169
        %p325 = pneg %p198
        %p326 = pneg %p195
        %p327 = scmp.lt.s32.totalorder %s25, 1
        %s328 = scalar_select %p327, %s25, 1
        %s329 = smul.addr %s328, 8
        %s330 = scalar_lea.vmem %s7, %s329
        %p331 = pneg %p224
        %p332 = pneg %p221
        %s333 = sand.u32 %s211, 1
        %s334 = scalar_lea.sflag [#allocation4], %s333
        %s335 = sand.u32 %s211, 1
        %s336 = smul.addr %s335, 8
        %s337 = scalar_lea.vmem [#allocation7], %s336
        %p338 = scmp.lt.s32.totalorder %s25, 1
        %s339 = scalar_select %p338, %s25, 1
        %s340 = smul.addr %s339, 8
        %s341 = scalar_lea.vmem %s0, %s340
        %p342 = scmp.lt.s32.totalorder %s25, 1
        %s343 = scalar_select %p342, %s25, 1
        %s344 = smul.addr %s343, 8
        %s345 = scalar_lea.vmem %s7, %s344
        %v347 = vld [vmem:[%s2] sm:$0x1]
        %v348 = vld [vmem:[%s4] sm:$0x1]
        %v349 = vld [vmem:[%s6] sm:$0x1]
        %v350 = vld [vmem:[%s341] sm:$0xff]
        %v351 = vpack.c.bf16 %v350, %v350
        %v352 = vld [vmem:[#allocation2] sm:$0xf]
        %v353 = vld [vmem:[#allocation2 + $0x4] sm:$0xf]
        %v354 = vld [vmem:[#allocation2 + $0x8] sm:$0xf]
        %v355 = vld [vmem:[#allocation2 + $0xc] sm:$0xf]
        %v357 = vperm.slane %v347, 0
        %v363 = vunpack.c.l.b16 %v352
        %v364 = vunpack.c.l.b16 %v353
        %v365 = vunpack.c.l.b16 %v354
        %v366 = vunpack.c.l.b16 %v355
        %v367 = vpack.c.b16 %v364, %v363
        %v368 = vpack.c.b16 %v366, %v365
        %vm371 = vcmask 261120
        %v373 = vsel %vm371, %v351, 0
        %375 = vmatpush.bf16.msra.mxu0 0
        %376 = vmatpush.bf16.msra.mxu0 0
        %377 = vmatpush.bf16.msra.mxu0 0
        %378 = vmatpush.bf16.msra.mxu0 0
        %379 = vmatpush.bf16.msra.mxu0 0
        %380 = vmatpush.bf16.msra.mxu0 0
        %381 = vmatpush.bf16.msra.mxu0 %v368
        %382 = vmatpush.bf16.msra.mxu0 %v367
        %383 = vmatmul.bf16.gmra.mxu0 %v373
        %v384 = vpop.f32.mrf.mxu0
        %v385 = vadd.f32 %v357, %v384
        %v386 = vpop.f32.mrf.mxu0
        %387 = vdwg.mxu0
        %v388 = vmax.f32 %v385, 0.0
        %v389 = vpack.c.bf16 %v388, %v388
        %v390 = vld [vmem:[#allocation5] sm:$0xf]
        %v391 = vld [vmem:[#allocation5 + $0x4] sm:$0xf]
        %v392 = vld [vmem:[#allocation5 + $0x8] sm:$0xf]
        %v393 = vld [vmem:[#allocation5 + $0xc] sm:$0xf]
        %v395 = vperm.slane %v348, 0
        %v401 = vunpack.c.l.b16 %v390
        %v402 = vunpack.c.l.b16 %v391
        %v403 = vunpack.c.l.b16 %v392
        %v404 = vunpack.c.l.b16 %v393
        %v405 = vpack.c.b16 %v402, %v401
        %v406 = vpack.c.b16 %v404, %v403
        %v410 = vsel %vm371, %v389, 0
        %412 = vmatpush.bf16.msra.mxu0 0
        %413 = vmatpush.bf16.msra.mxu0 0
        %414 = vmatpush.bf16.msra.mxu0 0
        %415 = vmatpush.bf16.msra.mxu0 0
        %416 = vmatpush.bf16.msra.mxu0 0
        %417 = vmatpush.bf16.msra.mxu0 0
        %418 = vmatpush.bf16.msra.mxu0 %v406
        %419 = vmatpush.bf16.msra.mxu0 %v405
        %420 = vmatmul.bf16.gmra.mxu0 %v410
        %v421 = vpop.f32.mrf.mxu0
        %v422 = vadd.f32 %v395, %v421
        %v423 = vpop.f32.mrf.mxu0
        %424 = vdwg.mxu0
        %v425 = vmax.f32 %v422, 0.0
        %v426 = vpack.c.bf16 %v425, %v425
        %v427 = vld [vmem:[%s5] sm:$0xf]
        %v428 = vld [vmem:[%s5 + $0x4] sm:$0xf]
        %v429 = vld [vmem:[%s5 + $0x8] sm:$0xf]
        %v430 = vld [vmem:[%s5 + $0xc] sm:$0xf]
        %v432 = vperm.slane %v349, 0
        %v438 = vunpack.c.l.b16 %v427
        %v439 = vunpack.c.l.b16 %v428
        %v440 = vunpack.c.l.b16 %v429
        %v441 = vunpack.c.l.b16 %v430
        %v442 = vpack.c.b16 %v439, %v438
        %v443 = vpack.c.b16 %v441, %v440
        %v447 = vsel %vm371, %v426, 0
        %449 = vmatpush.bf16.msra.mxu0 0
        %450 = vmatpush.bf16.msra.mxu0 0
        %451 = vmatpush.bf16.msra.mxu0 0
        %452 = vmatpush.bf16.msra.mxu0 0
        %453 = vmatpush.bf16.msra.mxu0 0
        %454 = vmatpush.bf16.msra.mxu0 0
        %455 = vmatpush.bf16.msra.mxu0 %v443
        %456 = vmatpush.bf16.msra.mxu0 %v442
        %457 = vmatmul.bf16.gmra.mxu0 %v447
        %v458 = vpop.f32.mrf.mxu0
        %v459 = vadd.f32 %v432, %v458
        %v460 = vpop.f32.mrf.mxu0
        %461 = vdwg.mxu0
        %462 = vst.msk [vmem:[%s337] sm:$0xff] %vm371, %v425
        %vm463 = vcmask 31744
        %464 = vst.msk [vmem:[%s345] sm:$0xff] %vm463, %v459
        %p465 = scmp.lt.s32.totalorder %s25, 1
        %s466 = scalar_select %p465, %s25, 1
        %s467 = smul.addr %s466, 8
        %s468 = scalar_lea.vmem %s7, %s467
        %s469 = sand.u32 %s211, 1
        %s470 = scalar_lea.sflag [#allocation4], %s469
        %s471 = sand.u32 %s211, 1
        %s472 = smul.addr %s471, 8
        %s473 = scalar_lea.vmem [#allocation7], %s472
        // Predicated region
        $region57: #{insmlp_forward.1} parent=47 // pred_check
          %p474 = pneg %p195
        $region58: #{insmlp_forward.1} parent=47 // pred_check_branch
          %476 = sbr.rel (%p474) target = $region60
        $region59: #{insmlp_forward.1} parent=47 // pred_region
          _
        $region60: #{insmlp_forward.1} parent=47 // pred_fallthru
          _
        // Predicated region
        $region61: #{insmlp_forward.1} parent=47 // pred_check
          %p477 = pneg %p221
        $region62: #{insmlp_forward.1} parent=47 // pred_check_branch
          %479 = sbr.rel (%p477) target = $region64
        $region63: #{insmlp_forward.1} parent=47 // pred_region
          %481 = vsyncadd %s470, 0
          %s482 = smul.addr %s25, 8
          %s483 = scalar_lea.hbm %s8, %s482
          %s485 = sshll.u32 %s473, 4
          %s486 = int_to_ptr.vmem [resolvable:$true] %s485
          %s487 = sshll.u32 %s483, 4
          %s488 = int_to_ptr.hbm [resolvable:$true] %s487
          %490 = dma.vmem_to_hbm [thread:$0]  %s486, 128, %s488, %s470
        $region64: #{insmlp_forward.1} parent=47 // pred_fallthru
          _
      $region48: #{insmlp_forward.1} parent=5 // pred_fallthru
        _
      %p491 = scmp.le.s32.totalorder 2, %s20
      // Predicated region
      $region65: #{insmlp_forward.1} parent=5 // pred_check
        %p492 = pneg %p491
      $region66: #{insmlp_forward.1} parent=5 // pred_check_branch
        %494 = sbr.rel (%p492) target = $region68
      $region67: #{insmlp_forward.1} parent=5 // pred_region
        %s495 = ssub.s32 %s20, 2
        // Predicated region
        $region69: #{insmlp_forward.1} parent=67 // pred_check
          %p496 = pneg %p201
        $region70: #{insmlp_forward.1} parent=67 // pred_check_branch
          %498 = sbr.rel (%p496) target = $region72
        $region71: #{insmlp_forward.1} parent=67 // pred_region
          %p499 = scmp.lt.s32.totalorder %s26, 1
          %s500 = scalar_select %p499, %s26, 1
          %s501 = smul.addr %s500, 8
          %s502 = scalar_lea.vmem %s7, %s501
        $region72: #{insmlp_forward.1} parent=67 // pred_fallthru
          _
        // Predicated region
        $region73: #{insmlp_forward.1} parent=67 // pred_check
          %p503 = pneg %p227
        $region74: #{insmlp_forward.1} parent=67 // pred_check_branch
          %505 = sbr.rel (%p503) target = $region76
        $region75: #{insmlp_forward.1} parent=67 // pred_region
          %s506 = sand.u32 %s212, 1
          %s507 = scalar_lea.sflag [#allocation4], %s506
          %s508 = sand.u32 %s212, 1
          %s509 = smul.addr %s508, 8
          %s510 = scalar_lea.vmem [#allocation7], %s509
          %512 = dma.done %s507, 128
        $region76: #{insmlp_forward.1} parent=67 // pred_fallthru
          _
      $region68: #{insmlp_forward.1} parent=5 // pred_fallthru
        _
    $region6: #{insmlp_forward.1} parent=1 // loop_footer
      %s24 = sadd.s32 1, %s20
    $region7: #{insmlp_forward.1} parent=1 // loop_footer_branch
      %19 = sbr.rel target = $region3
    $region8: #{insmlp_forward.1} parent=1 // loop_exit
      _
    %513 = vsyncpa [#allocation3], 1
    %s514 = scalar_lea.sflag [#allocation3], 1
    %515 = vsyncpa %s514, 1
    %516 = vsyncpa [#allocation6], 1
    %517 = vsyncpa [#allocation4], 1
    %s518 = scalar_lea.sflag [#allocation4], 1
    %519 = vsyncpa %s518, 1

</llo_original>
